<compile_context>
chip_gen: v6e
topology: v6e:2x2x1
jax: 0.10.0
libtpu: 0.0.40
codegen_flags: <defaults>
</compile_context>

<pallas_src>
import jax
import jax.numpy as jnp
from jax.experimental import pallas as pl
from jax.experimental.pallas import tpu as pltpu

H1, H2, H3 = 64, 32, 1  # layer widths from the PyTorch module


def _round_up(n, m):
    return ((n + m - 1) // m) * m


def mlp_kernel(xT_ref, w1_ref, b1_ref, w2_ref, b2_ref, w3_ref, b3_ref, o_ref):
    # Fused 3-layer MLP on one (input_dim, TM) batch tile; batch on the lane axis.
    xT = xT_ref[...]                                                     # (in, TM)
    h1 = jnp.dot(w1_ref[...], xT, preferred_element_type=jnp.float32)    # (64, TM)
    h1 = jnp.maximum(h1 + b1_ref[...], 0.0)
    h2 = jnp.dot(w2_ref[...], h1.astype(w2_ref.dtype),
                 preferred_element_type=jnp.float32)                     # (32, TM)
    h2 = jnp.maximum(h2 + b2_ref[...], 0.0)
    y = jnp.dot(w3_ref[...], h2.astype(w3_ref.dtype),
                preferred_element_type=jnp.float32) + b3_ref[...]        # (1, TM)
    o_ref[...] = y.astype(o_ref.dtype)                                   # lane-dense store


def mlp_regressor_forward(x, params, *, block_b=2048, compute_dtype=jnp.float32):
    """x: (B, input_dim) float32. params: torch-layout w1,b1,w2,b2,w3,b3.

    Returns (B, 1) float32, matching MLPRegressor.forward(x).
    """
    B, input_dim = x.shape

    # Lane-dense batch tile: multiple of 128, no larger than needed for small B.
    tm = min(_round_up(block_b, 128), max(128, _round_up(B, 128)))
    b_pad = _round_up(B, tm)
    n_blocks = b_pad // tm

    # Batch on the lane axis; zero-pad the ragged tail (extra lanes are computed
    # and discarded below).  Transpose/pad is wrapper-side layout plumbing.
    xT = jnp.pad(x.T.astype(compute_dtype), ((0, 0), (0, b_pad - B)))

    w1 = params["w1"].astype(compute_dtype)
    w2 = params["w2"].astype(compute_dtype)
    w3 = params["w3"].astype(compute_dtype)
    b1 = params["b1"].astype(jnp.float32)
    b2 = params["b2"].astype(jnp.float32)
    b3 = params["b3"].astype(jnp.float32)

    def resident(arr):
        # Full-array block, same block index every grid step -> single DMA, stays in VMEM.
        return pl.BlockSpec(arr.shape, lambda i: (0, 0))

    itemsize = jnp.dtype(compute_dtype).itemsize
    cost = pl.CostEstimate(
        flops=2 * b_pad * (input_dim * H1 + H1 * H2 + H2 * H3),
        transcendentals=0,
        bytes_accessed=(xT.size * itemsize + b_pad * H3 * 4
                        + (w1.size + w2.size + w3.size) * itemsize
                        + (b1.size + b2.size + b3.size) * 4),
    )

    out = pl.pallas_call(
        mlp_kernel,
        out_shape=jax.ShapeDtypeStruct((1, b_pad), jnp.float32),
        grid=(n_blocks,),
        in_specs=[
            pl.BlockSpec((input_dim, tm), lambda i: (0, i)),   # streamed x tile
            resident(w1), resident(b1),
            resident(w2), resident(b2),
            resident(w3), resident(b3),
        ],
        out_specs=pl.BlockSpec((1, tm), lambda i: (0, i)),      # lane-dense output tile
        compiler_params=pltpu.CompilerParams(
            dimension_semantics=("parallel",)),
        cost_estimate=cost,
    )(xT, w1, b1, w2, b2, w3, b3)

    return out[0, :B].reshape(B, 1)


def init_params(key, input_dim):
    """Deterministic synthetic init (PyTorch-style uniform bounds), torch weight layout."""
    ks = jax.random.split(key, 6)

    def linear(kw, kb, fan_in, fan_out):
        bound = 1.0 / jnp.sqrt(float(fan_in))
        w = jax.random.uniform(kw, (fan_out, fan_in), jnp.float32, -bound, bound)
        b = jax.random.uniform(kb, (fan_out, 1), jnp.float32, -bound, bound)
        return w, b

    w1, b1 = linear(ks[0], ks[1], input_dim, H1)
    w2, b2 = linear(ks[2], ks[3], H1, H2)
    w3, b3 = linear(ks[4], ks[5], H2, H3)
    return {"w1": w1, "b1": b1, "w2": w2, "b2": b2, "w3": w3, "b3": b3}


def mlp_ref(x, p):
    h1 = jnp.maximum(x @ p["w1"].T + p["b1"].T, 0.0)
    h2 = jnp.maximum(h1 @ p["w2"].T + p["b2"].T, 0.0)
    return h2 @ p["w3"].T + p["b3"].T


if __name__ == "__main__":
    key = jax.random.PRNGKey(0)
    k_param, k_x1, k_x2 = jax.random.split(key, 3)

    input_dim = 16
    params = init_params(k_param, input_dim)

    # Small batch (exercises tail padding: 8 rows -> one 128-wide tile).
    x_small = jax.random.normal(k_x1, (8, input_dim), jnp.float32)
    out_small = jax.block_until_ready(mlp_regressor_forward(x_small, params))
    assert out_small.shape == (8, 1), out_small.shape
    assert jnp.allclose(out_small, mlp_ref(x_small, params), atol=1e-5, rtol=1e-5)

    # Ragged multi-block batch (200 rows, TM=128 -> 2 grid steps + tail padding).
    x_big = jax.random.normal(k_x2, (200, input_dim), jnp.float32)
    out_big = jax.block_until_ready(
        mlp_regressor_forward(x_big, params, block_b=128))
    assert out_big.shape == (200, 1), out_big.shape
    assert jnp.allclose(out_big, mlp_ref(x_big, params), atol=1e-5, rtol=1e-5)

    print("KERNEL_OK")
</pallas_src>

<mosaic_0001>
module attributes {stable_mosaic.version = 11 : i64} {
  func.func @mlp_kernel(%arg0: i32, %arg1: memref<16x128xf32, #tpu.memory_space<vmem>>, %arg2: memref<64x16xf32, #tpu.memory_space<vmem>>, %arg3: memref<64x1xf32, #tpu.memory_space<vmem>>, %arg4: memref<32x64xf32, #tpu.memory_space<vmem>>, %arg5: memref<32x1xf32, #tpu.memory_space<vmem>>, %arg6: memref<1x32xf32, #tpu.memory_space<vmem>>, %arg7: memref<1x1xf32, #tpu.memory_space<vmem>>, %arg8: memref<1x128xf32, #tpu.memory_space<vmem>>) attributes {dimension_semantics = [#tpu.dimension_semantics<parallel>], iteration_bounds = array<i64: 1>, scalar_prefetch = 0 : i64, scratch_operands = 0 : i64, tpu.core_type = #tpu.core_type<tc>, window_params = [{transform_indices = @transform_0, window_bounds = array<i64: 16, 128>}, {pipeline_mode = #tpu.pipeline_mode<synchronous>, transform_indices = @transform_1, window_bounds = array<i64: 64, 16>}, {pipeline_mode = #tpu.pipeline_mode<synchronous>, transform_indices = @transform_2, window_bounds = array<i64: 64, 1>}, {pipeline_mode = #tpu.pipeline_mode<synchronous>, transform_indices = @transform_3, window_bounds = array<i64: 32, 64>}, {pipeline_mode = #tpu.pipeline_mode<synchronous>, transform_indices = @transform_4, window_bounds = array<i64: 32, 1>}, {pipeline_mode = #tpu.pipeline_mode<synchronous>, transform_indices = @transform_5, window_bounds = array<i64: 1, 32>}, {pipeline_mode = #tpu.pipeline_mode<synchronous>, transform_indices = @transform_6, window_bounds = array<i64: 1, 1>}, {transform_indices = @transform_7, window_bounds = array<i64: 1, 128>}]} {
    %c0 = arith.constant 0 : index
    %c0_0 = arith.constant 0 : index
    %0 = vector.load %arg1[%c0, %c0_0] : memref<16x128xf32, #tpu.memory_space<vmem>>, vector<16x128xf32>
    %c0_1 = arith.constant 0 : index
    %c0_2 = arith.constant 0 : index
    %1 = vector.load %arg2[%c0_1, %c0_2] : memref<64x16xf32, #tpu.memory_space<vmem>>, vector<64x16xf32>
    %cst = arith.constant dense<0.000000e+00> : vector<64x128xf32>
    %2 = tpu.matmul %1, %0, %cst {dimension_numbers = #tpu.dot_dimension_numbers<[1], [0], [0], [1], [0, 0, 1, 1], [], []>} : vector<64x16xf32>, vector<16x128xf32>, vector<64x128xf32> -> vector<64x128xf32>
    %c0_3 = arith.constant 0 : index
    %c0_4 = arith.constant 0 : index
    %3 = vector.load %arg3[%c0_3, %c0_4] : memref<64x1xf32, #tpu.memory_space<vmem>>, vector<64x1xf32>
    %4 = vector.broadcast %3 : vector<64x1xf32> to vector<64x128xf32>
    %5 = arith.addf %2, %4 : vector<64x128xf32>
    %cst_5 = arith.constant 0.000000e+00 : f32
    %6 = vector.broadcast %cst_5 : f32 to vector<64x128xf32>
    %7 = arith.maximumf %5, %6 : vector<64x128xf32>
    %c0_6 = arith.constant 0 : index
    %c0_7 = arith.constant 0 : index
    %8 = vector.load %arg4[%c0_6, %c0_7] : memref<32x64xf32, #tpu.memory_space<vmem>>, vector<32x64xf32>
    %cst_8 = arith.constant dense<0.000000e+00> : vector<32x128xf32>
    %9 = tpu.matmul %8, %7, %cst_8 {dimension_numbers = #tpu.dot_dimension_numbers<[1], [0], [0], [1], [0, 0, 1, 1], [], []>} : vector<32x64xf32>, vector<64x128xf32>, vector<32x128xf32> -> vector<32x128xf32>
    %c0_9 = arith.constant 0 : index
    %c0_10 = arith.constant 0 : index
    %10 = vector.load %arg5[%c0_9, %c0_10] : memref<32x1xf32, #tpu.memory_space<vmem>>, vector<32x1xf32>
    %11 = vector.broadcast %10 : vector<32x1xf32> to vector<32x128xf32>
    %12 = arith.addf %9, %11 : vector<32x128xf32>
    %cst_11 = arith.constant 0.000000e+00 : f32
    %13 = vector.broadcast %cst_11 : f32 to vector<32x128xf32>
    %14 = arith.maximumf %12, %13 : vector<32x128xf32>
    %c0_12 = arith.constant 0 : index
    %c0_13 = arith.constant 0 : index
    %15 = vector.load %arg6[%c0_12, %c0_13] : memref<1x32xf32, #tpu.memory_space<vmem>>, vector<1x32xf32>
    %cst_14 = arith.constant dense<0.000000e+00> : vector<1x128xf32>
    %16 = tpu.matmul %15, %14, %cst_14 {dimension_numbers = #tpu.dot_dimension_numbers<[1], [0], [0], [1], [0, 0, 1, 1], [], []>} : vector<1x32xf32>, vector<32x128xf32>, vector<1x128xf32> -> vector<1x128xf32>
    %c0_15 = arith.constant 0 : index
    %c0_16 = arith.constant 0 : index
    %17 = vector.load %arg7[%c0_15, %c0_16] : memref<1x1xf32, #tpu.memory_space<vmem>>, vector<1x1xf32>
    %18 = vector.broadcast %17 : vector<1x1xf32> to vector<1x128xf32>
    %19 = arith.addf %16, %18 : vector<1x128xf32>
    %c0_17 = arith.constant 0 : index
    %c0_18 = arith.constant 0 : index
    %20 = vector.load %arg8[%c0_17, %c0_18] : memref<1x128xf32, #tpu.memory_space<vmem>>, vector<1x128xf32>
    tpu.vector_store %arg8[%c0_17, %c0_18], %19 {strides = array<i32>} : memref<1x128xf32, #tpu.memory_space<vmem>>, vector<1x128xf32>,
    return
  }
  func.func @transform_0(%arg0: i32) -> (i32, i32) {
    %c0_i32 = arith.constant 0 : i32
    %c0_i32_0 = arith.constant 0 : i32
    return %c0_i32, %arg0 : i32, i32
  }
  func.func @transform_1(%arg0: i32) -> (i32, i32) {
    %c0_i32 = arith.constant 0 : i32
    %c0_i32_0 = arith.constant 0 : i32
    %c0_i32_1 = arith.constant 0 : i32
    return %c0_i32, %c0_i32_0 : i32, i32
  }
  func.func @transform_2(%arg0: i32) -> (i32, i32) {
    %c0_i32 = arith.constant 0 : i32
    %c0_i32_0 = arith.constant 0 : i32
    %c0_i32_1 = arith.constant 0 : i32
    return %c0_i32, %c0_i32_0 : i32, i32
  }
  func.func @transform_3(%arg0: i32) -> (i32, i32) {
    %c0_i32 = arith.constant 0 : i32
    %c0_i32_0 = arith.constant 0 : i32
    %c0_i32_1 = arith.constant 0 : i32
    return %c0_i32, %c0_i32_0 : i32, i32
  }
  func.func @transform_4(%arg0: i32) -> (i32, i32) {
    %c0_i32 = arith.constant 0 : i32
    %c0_i32_0 = arith.constant 0 : i32
    %c0_i32_1 = arith.constant 0 : i32
    return %c0_i32, %c0_i32_0 : i32, i32
  }
  func.func @transform_5(%arg0: i32) -> (i32, i32) {
    %c0_i32 = arith.constant 0 : i32
    %c0_i32_0 = arith.constant 0 : i32
    %c0_i32_1 = arith.constant 0 : i32
    return %c0_i32, %c0_i32_0 : i32, i32
  }
  func.func @transform_6(%arg0: i32) -> (i32, i32) {
    %c0_i32 = arith.constant 0 : i32
    %c0_i32_0 = arith.constant 0 : i32
    %c0_i32_1 = arith.constant 0 : i32
    return %c0_i32, %c0_i32_0 : i32, i32
  }
  func.func @transform_7(%arg0: i32) -> (i32, i32) {
    %c0_i32 = arith.constant 0 : i32
    %c0_i32_0 = arith.constant 0 : i32
    return %c0_i32, %arg0 : i32, i32
  }
}

</mosaic_0001>

<llo_original>
// kernel: tpu_custom_call.1
$region0: #{tpu_custom_call.1}
  #allocation0 [shape = 'u32[]', space=smem, size = 0x4, offset = 0x4, fixed_abs, tag = 'smem constant byte address 0x4 - core index']
  #allocation1 [shape = 'u32[144,128]{1,0:T(1,128)}', space=vmem, size = 0x12000, scoped, tag = 'internal scratch']
  #allocation2 [shape = 'f32[1,1]{1,0:T(1,128)S(1)}', space=vmem, size = 0x200, scoped, tag = 'scoped memory for tpu_custom_call.1']
  %s0 = inlined_call_operand.vmem [shape: f32[16,128], index: 0, kind: input, shape index: {}]
  %s1 = inlined_call_operand.vmem [shape: f32[64,16], index: 1, kind: input, shape index: {}]
  %s2 = inlined_call_operand.vmem [shape: f32[64,1], index: 2, kind: input, shape index: {}]
  %s3 = inlined_call_operand.vmem [shape: f32[32,64], index: 3, kind: input, shape index: {}]
  %s4 = inlined_call_operand.vmem [shape: f32[32,1], index: 4, kind: input, shape index: {}]
  %s5 = inlined_call_operand.vmem [shape: f32[1,32], index: 5, kind: input, shape index: {}]
  %s6 = inlined_call_operand.<no memory space> [shape: f32[1,1], index: 6, kind: input, shape index: {}]
  %s7 = inlined_call_operand.hbm [shape: f32[1,128], index: 7, kind: output, shape index: {}]
  %s8 = sld [smem:[#allocation0]]
  $region38: #{tpu_custom_call.1} parent=0
    _
  %s10 = ssub.s32 1, %s8
  %s11 = scalar_select 0, %s10, %s8
  %v12 = vstv %s6
  %13 = vst [vmem:[#allocation2] sm:$0x1] %v12
  $region1: #{tpu_custom_call.1} parent=0
    #allocation3 [shape = 'u8[512]{0}', space=vmem, size = 0x400, scoped, tag = 'output window, operand 0, single buffered']
    #allocation4 [shape = 's32[1]{0}', space=sflag, size = 0x4, scoped, tag = 'scoped memory for tpu_custom_call.1']
    %14 = vsyncpa [#allocation4], 0
    // Predicated region
    $region2: #{tpu_custom_call.1} parent=1 // pred_check
      _
    $region3: #{tpu_custom_call.1} parent=1 // pred_check_branch
      %16 = sbr.rel (0) target = $region5
    $region4: #{tpu_custom_call.1} parent=1 // pred_region
      _
    $region5: #{tpu_custom_call.1} parent=1 // pred_fallthru
      _
    // Predicated region
    $region6: #{tpu_custom_call.1} parent=1 // pred_check
      _
    $region7: #{tpu_custom_call.1} parent=1 // pred_check_branch
      %18 = sbr.rel (0) target = $region9
    $region8: #{tpu_custom_call.1} parent=1 // pred_region
      _
    $region9: #{tpu_custom_call.1} parent=1 // pred_fallthru
      _
    // Predicated region
    $region10: #{tpu_custom_call.1} parent=1 // pred_check
      _
    $region11: #{tpu_custom_call.1} parent=1 // pred_check_branch
      %20 = sbr.rel (0) target = $region13
    $region12: #{tpu_custom_call.1} parent=1 // pred_region
      _
    $region13: #{tpu_custom_call.1} parent=1 // pred_fallthru
      _
    // Predicated region
    $region14: #{tpu_custom_call.1} parent=1 // pred_check
      _
    $region15: #{tpu_custom_call.1} parent=1 // pred_check_branch
      %22 = sbr.rel (0) target = $region17
    $region16: #{tpu_custom_call.1} parent=1 // pred_region
      _
    $region17: #{tpu_custom_call.1} parent=1 // pred_fallthru
      _
    // Predicated region
    $region18: #{tpu_custom_call.1} parent=1 // pred_check
      _
    $region19: #{tpu_custom_call.1} parent=1 // pred_check_branch
      %24 = sbr.rel (0) target = $region21
    $region20: #{tpu_custom_call.1} parent=1 // pred_region
      _
    $region21: #{tpu_custom_call.1} parent=1 // pred_fallthru
      _
    // Predicated region
    $region22: #{tpu_custom_call.1} parent=1 // pred_check
      _
    $region23: #{tpu_custom_call.1} parent=1 // pred_check_branch
      %26 = sbr.rel (0) target = $region25
    $region24: #{tpu_custom_call.1} parent=1 // pred_region
      _
    $region25: #{tpu_custom_call.1} parent=1 // pred_fallthru
      _
    // Predicated region
    $region26: #{tpu_custom_call.1} parent=1 // pred_check
      _
    $region27: #{tpu_custom_call.1} parent=1 // pred_check_branch
      %28 = sbr.rel (0) target = $region29
    $region28: #{tpu_custom_call.1} parent=1 // pred_region
      _
    $region29: #{tpu_custom_call.1} parent=1 // pred_fallthru
      _
    %v29 = vld [vmem:[%s0] sm:$0xff]
    %v30 = vld [vmem:[%s0 + $0x8] sm:$0xff]
    %v31 = vld [vmem:[%s1] sm:$0xff]
    %v32 = vld [vmem:[%s1 + $0x8] sm:$0xff]
    %v33 = vld [vmem:[%s1 + $0x10] sm:$0xff]
    %v34 = vld [vmem:[%s1 + $0x18] sm:$0xff]
    %v35 = vld [vmem:[%s1 + $0x20] sm:$0xff]
    %v36 = vld [vmem:[%s1 + $0x28] sm:$0xff]
    %v37 = vld [vmem:[%s1 + $0x30] sm:$0xff]
    %v38 = vld [vmem:[%s1 + $0x38] sm:$0xff]
    %v39 = vld [vmem:[%s2] sm:$0xff]
    %v40 = vld [vmem:[%s2 + $0x8] sm:$0xff]
    %v41 = vld [vmem:[%s2 + $0x10] sm:$0xff]
    %v42 = vld [vmem:[%s2 + $0x18] sm:$0xff]
    %v43 = vld [vmem:[%s2 + $0x20] sm:$0xff]
    %v44 = vld [vmem:[%s2 + $0x28] sm:$0xff]
    %v45 = vld [vmem:[%s2 + $0x30] sm:$0xff]
    %v46 = vld [vmem:[%s2 + $0x38] sm:$0xff]
    %48 = vset.pattern.permute.xlu0 0
    %49 = vperm.xlu0 %48, %v39
    %v50 = vpop.permute.xlu0 %49
    %53 = vset.pattern.permute.xlu0 0
    %54 = vperm.xlu0 %53, %v40
    %v55 = vpop.permute.xlu0 %54
    %58 = vset.pattern.permute.xlu0 0
    %59 = vperm.xlu0 %58, %v41
    %v60 = vpop.permute.xlu0 %59
    %63 = vset.pattern.permute.xlu0 0
    %64 = vperm.xlu0 %63, %v42
    %v65 = vpop.permute.xlu0 %64
    %68 = vset.pattern.permute.xlu0 0
    %69 = vperm.xlu0 %68, %v43
    %v70 = vpop.permute.xlu0 %69
    %73 = vset.pattern.permute.xlu0 0
    %74 = vperm.xlu0 %73, %v44
    %v75 = vpop.permute.xlu0 %74
    %78 = vset.pattern.permute.xlu0 0
    %79 = vperm.xlu0 %78, %v45
    %v80 = vpop.permute.xlu0 %79
    %83 = vset.pattern.permute.xlu0 0
    %84 = vperm.xlu0 %83, %v46
    %v85 = vpop.permute.xlu0 %84
    %vm87 = vcmask 130048
    %v89 = vsel %vm87, %v31, 0
    %v92 = vsel %vm87, %v32, 0
    %v95 = vsel %vm87, %v33, 0
    %v98 = vsel %vm87, %v34, 0
    %v101 = vsel %vm87, %v35, 0
    %v104 = vsel %vm87, %v36, 0
    %v107 = vsel %vm87, %v37, 0
    %v110 = vsel %vm87, %v38, 0
    %112 = vmatprep.subr.mxu0 0.0
    %113 = vmatpush1.msra.mxu0 0.0
    %114 = vmatprep.subr.mxu0 0.0
    %115 = vmatpush1.msra.mxu0 0.0
    %116 = vmatprep.subr.mxu0 0.0
    %117 = vmatpush1.msra.mxu0 0.0
    %118 = vmatprep.subr.mxu0 0.0
    %119 = vmatpush1.msra.mxu0 0.0
    %120 = vmatprep.subr.mxu0 0.0
    %121 = vmatpush1.msra.mxu0 0.0
    %122 = vmatprep.subr.mxu0 0.0
    %123 = vmatpush1.msra.mxu0 0.0
    %124 = vmatprep.subr.mxu0 0.0
    %125 = vmatpush1.msra.mxu0 0.0
    %126 = vmatprep.subr.mxu0 0.0
    %127 = vmatpush1.msra.mxu0 0.0
    %128 = vmatprep.subr.mxu0 0.0
    %129 = vmatpush1.msra.mxu0 0.0
    %130 = vmatprep.subr.mxu0 0.0
    %131 = vmatpush1.msra.mxu0 0.0
    %132 = vmatprep.subr.mxu0 0.0
    %133 = vmatpush1.msra.mxu0 0.0
    %134 = vmatprep.subr.mxu0 0.0
    %135 = vmatpush1.msra.mxu0 0.0
    %136 = vmatprep.subr.mxu0 0.0
    %137 = vmatpush1.msra.mxu0 0.0
    %138 = vmatprep.subr.mxu0 0.0
    %139 = vmatpush1.msra.mxu0 0.0
    %140 = vmatprep.subr.mxu0 0.0
    %141 = vmatpush1.msra.mxu0 %v30
    %142 = vmatprep.subr.mxu0 0.0
    %143 = vmatpush1.msra.mxu0 %v29
    %144 = vmatprep.subr.mxu0 0.0
    %145 = vmatpush2.msra.mxu0 0.0
    %146 = vmatprep.subr.mxu0 0.0
    %147 = vmatpush2.msra.mxu0 0.0
    %148 = vmatprep.subr.mxu0 0.0
    %149 = vmatpush2.msra.mxu0 0.0
    %150 = vmatprep.subr.mxu0 0.0
    %151 = vmatpush2.msra.mxu0 0.0
    %152 = vmatprep.subr.mxu0 0.0
    %153 = vmatpush2.msra.mxu0 0.0
    %154 = vmatprep.subr.mxu0 0.0
    %155 = vmatpush2.msra.mxu0 0.0
    %156 = vmatprep.subr.mxu0 0.0
    %157 = vmatpush2.msra.mxu0 0.0
    %158 = vmatprep.subr.mxu0 0.0
    %159 = vmatpush2.msra.mxu0 0.0
    %160 = vmatprep.subr.mxu0 0.0
    %161 = vmatpush2.msra.mxu0 0.0
    %162 = vmatprep.subr.mxu0 0.0
    %163 = vmatpush2.msra.mxu0 0.0
    %164 = vmatprep.subr.mxu0 0.0
    %165 = vmatpush2.msra.mxu0 0.0
    %166 = vmatprep.subr.mxu0 0.0
    %167 = vmatpush2.msra.mxu0 0.0
    %168 = vmatprep.subr.mxu0 0.0
    %169 = vmatpush2.msra.mxu0 0.0
    %170 = vmatprep.subr.mxu0 0.0
    %171 = vmatpush2.msra.mxu0 0.0
    %172 = vmatprep.subr.mxu0 0.0
    %173 = vmatpush2.msra.mxu0 0.0
    %174 = vmatprep.subr.mxu0 0.0
    %175 = vmatpush2.msra.mxu0 0.0
    %176 = vmatprep.mubr.f32.mxu0 0.0
    %177 = vmatmul.mubr.f32.gmra.mxu0 %v89
    %v178 = vpop.f32.mrf.mxu0
    %v179 = vadd.f32 %v50, %v178
    %v180 = vpop.f32.mrf.mxu0
    %181 = vmatprep.mubr.f32.mxu0 0.0
    %182 = vmatmul.mubr.f32.gmra.mxu0 %v92
    %v183 = vpop.f32.mrf.mxu0
    %v184 = vadd.f32 %v55, %v183
    %v185 = vpop.f32.mrf.mxu0
    %186 = vmatprep.mubr.f32.mxu0 0.0
    %187 = vmatmul.mubr.f32.gmra.mxu0 %v95
    %v188 = vpop.f32.mrf.mxu0
    %v189 = vadd.f32 %v60, %v188
    %v190 = vpop.f32.mrf.mxu0
    %191 = vmatprep.mubr.f32.mxu0 0.0
    %192 = vmatmul.mubr.f32.gmra.mxu0 %v98
    %v193 = vpop.f32.mrf.mxu0
    %v194 = vadd.f32 %v65, %v193
    %v195 = vpop.f32.mrf.mxu0
    %196 = vmatprep.mubr.f32.mxu0 0.0
    %197 = vmatmul.mubr.f32.gmra.mxu0 %v101
    %v198 = vpop.f32.mrf.mxu0
    %v199 = vadd.f32 %v70, %v198
    %v200 = vpop.f32.mrf.mxu0
    %201 = vmatprep.mubr.f32.mxu0 0.0
    %202 = vmatmul.mubr.f32.gmra.mxu0 %v104
    %v203 = vpop.f32.mrf.mxu0
    %v204 = vadd.f32 %v75, %v203
    %v205 = vpop.f32.mrf.mxu0
    %206 = vmatprep.mubr.f32.mxu0 0.0
    %207 = vmatmul.mubr.f32.gmra.mxu0 %v107
    %v208 = vpop.f32.mrf.mxu0
    %v209 = vadd.f32 %v80, %v208
    %v210 = vpop.f32.mrf.mxu0
    %211 = vmatprep.mubr.f32.mxu0 0.0
    %212 = vmatmul.mubr.f32.gmra.mxu0 %v110
    %v213 = vpop.f32.mrf.mxu0
    %v214 = vadd.f32 %v85, %v213
    %v215 = vpop.f32.mrf.mxu0
    %216 = vdwg.mxu0
    %v217 = vmax.f32 %v179, 0.0
    %v218 = vmax.f32 %v184, 0.0
    %v219 = vmax.f32 %v189, 0.0
    %v220 = vmax.f32 %v194, 0.0
    %v221 = vmax.f32 %v199, 0.0
    %v222 = vmax.f32 %v204, 0.0
    %v223 = vmax.f32 %v209, 0.0
    %v224 = vmax.f32 %v214, 0.0
    %v225 = vld [vmem:[%s3] sm:$0xff]
    %v226 = vld [vmem:[%s3 + $0x8] sm:$0xff]
    %v227 = vld [vmem:[%s3 + $0x10] sm:$0xff]
    %v228 = vld [vmem:[%s3 + $0x18] sm:$0xff]
    %v229 = vld [vmem:[%s4] sm:$0xff]
    %v230 = vld [vmem:[%s4 + $0x8] sm:$0xff]
    %v231 = vld [vmem:[%s4 + $0x10] sm:$0xff]
    %v232 = vld [vmem:[%s4 + $0x18] sm:$0xff]
    %234 = vset.pattern.permute.xlu0 0
    %235 = vperm.xlu0 %234, %v229
    %v236 = vpop.permute.xlu0 %235
    %239 = vset.pattern.permute.xlu0 0
    %240 = vperm.xlu0 %239, %v230
    %v241 = vpop.permute.xlu0 %240
    %244 = vset.pattern.permute.xlu0 0
    %245 = vperm.xlu0 %244, %v231
    %v246 = vpop.permute.xlu0 %245
    %249 = vset.pattern.permute.xlu0 0
    %250 = vperm.xlu0 %249, %v232
    %v251 = vpop.permute.xlu0 %250
    %vm253 = vcmask 523264
    %v255 = vsel %vm253, %v225, 0
    %v258 = vsel %vm253, %v226, 0
    %v261 = vsel %vm253, %v227, 0
    %v264 = vsel %vm253, %v228, 0
    %266 = vmatprep.subr.mxu0 0.0
    %267 = vmatpush1.msra.mxu0 0.0
    %268 = vmatprep.subr.mxu0 0.0
    %269 = vmatpush1.msra.mxu0 0.0
    %270 = vmatprep.subr.mxu0 0.0
    %271 = vmatpush1.msra.mxu0 0.0
    %272 = vmatprep.subr.mxu0 0.0
    %273 = vmatpush1.msra.mxu0 0.0
    %274 = vmatprep.subr.mxu0 0.0
    %275 = vmatpush1.msra.mxu0 0.0
    %276 = vmatprep.subr.mxu0 0.0
    %277 = vmatpush1.msra.mxu0 0.0
    %278 = vmatprep.subr.mxu0 0.0
    %279 = vmatpush1.msra.mxu0 0.0
    %280 = vmatprep.subr.mxu0 0.0
    %281 = vmatpush1.msra.mxu0 0.0
    %282 = vmatprep.subr.mxu0 0.0
    %283 = vmatpush1.msra.mxu0 %v224
    %284 = vmatprep.subr.mxu0 0.0
    %285 = vmatpush1.msra.mxu0 %v223
    %286 = vmatprep.subr.mxu0 0.0
    %287 = vmatpush1.msra.mxu0 %v222
    %288 = vmatprep.subr.mxu0 0.0
    %289 = vmatpush1.msra.mxu0 %v221
    %290 = vmatprep.subr.mxu0 0.0
    %291 = vmatpush1.msra.mxu0 %v220
    %292 = vmatprep.subr.mxu0 0.0
    %293 = vmatpush1.msra.mxu0 %v219
    %294 = vmatprep.subr.mxu0 0.0
    %295 = vmatpush1.msra.mxu0 %v218
    %296 = vmatprep.subr.mxu0 0.0
    %297 = vmatpush1.msra.mxu0 %v217
    %298 = vmatprep.subr.mxu0 0.0
    %299 = vmatpush2.msra.mxu0 0.0
    %300 = vmatprep.subr.mxu0 0.0
    %301 = vmatpush2.msra.mxu0 0.0
    %302 = vmatprep.subr.mxu0 0.0
    %303 = vmatpush2.msra.mxu0 0.0
    %304 = vmatprep.subr.mxu0 0.0
    %305 = vmatpush2.msra.mxu0 0.0
    %306 = vmatprep.subr.mxu0 0.0
    %307 = vmatpush2.msra.mxu0 0.0
    %308 = vmatprep.subr.mxu0 0.0
    %309 = vmatpush2.msra.mxu0 0.0
    %310 = vmatprep.subr.mxu0 0.0
    %311 = vmatpush2.msra.mxu0 0.0
    %312 = vmatprep.subr.mxu0 0.0
    %313 = vmatpush2.msra.mxu0 0.0
    %314 = vmatprep.subr.mxu0 0.0
    %315 = vmatpush2.msra.mxu0 0.0
    %316 = vmatprep.subr.mxu0 0.0
    %317 = vmatpush2.msra.mxu0 0.0
    %318 = vmatprep.subr.mxu0 0.0
    %319 = vmatpush2.msra.mxu0 0.0
    %320 = vmatprep.subr.mxu0 0.0
    %321 = vmatpush2.msra.mxu0 0.0
    %322 = vmatprep.subr.mxu0 0.0
    %323 = vmatpush2.msra.mxu0 0.0
    %324 = vmatprep.subr.mxu0 0.0
    %325 = vmatpush2.msra.mxu0 0.0
    %326 = vmatprep.subr.mxu0 0.0
    %327 = vmatpush2.msra.mxu0 0.0
    %328 = vmatprep.subr.mxu0 0.0
    %329 = vmatpush2.msra.mxu0 0.0
    %330 = vmatprep.mubr.f32.mxu0 0.0
    %331 = vmatmul.mubr.f32.gmra.mxu0 %v255
    %v332 = vpop.f32.mrf.mxu0
    %v333 = vadd.f32 %v236, %v332
    %v334 = vpop.f32.mrf.mxu0
    %335 = vmatprep.mubr.f32.mxu0 0.0
    %336 = vmatmul.mubr.f32.gmra.mxu0 %v258
    %v337 = vpop.f32.mrf.mxu0
    %v338 = vadd.f32 %v241, %v337
    %v339 = vpop.f32.mrf.mxu0
    %340 = vmatprep.mubr.f32.mxu0 0.0
    %341 = vmatmul.mubr.f32.gmra.mxu0 %v261
    %v342 = vpop.f32.mrf.mxu0
    %v343 = vadd.f32 %v246, %v342
    %v344 = vpop.f32.mrf.mxu0
    %345 = vmatprep.mubr.f32.mxu0 0.0
    %346 = vmatmul.mubr.f32.gmra.mxu0 %v264
    %v347 = vpop.f32.mrf.mxu0
    %v348 = vadd.f32 %v251, %v347
    %v349 = vpop.f32.mrf.mxu0
    %350 = vdwg.mxu0
    %v351 = vmax.f32 %v333, 0.0
    %v352 = vmax.f32 %v338, 0.0
    %v353 = vmax.f32 %v343, 0.0
    %v354 = vmax.f32 %v348, 0.0
    %v355 = vld [vmem:[%s5] sm:$0x1]
    %v356 = vld [vmem:[#allocation2] sm:$0x1]
    %358 = vset.pattern.permute.xlu0 0
    %359 = vperm.xlu0 %358, %v356
    %v360 = vpop.permute.xlu0 %359
    %v362 = vlaneseq
    %v363 = vshrl.u32 %v362, 7
    %v364 = vsub.s32 0, %v363
    %v365 = vrot.slane %v360, %v364
    %vm366 = vcmask 261120
    %v368 = vsel %vm366, %v355, 0
    %370 = vmatprep.subr.mxu0 0.0
    %371 = vmatpush1.msra.mxu0 0.0
    %372 = vmatprep.subr.mxu0 0.0
    %373 = vmatpush1.msra.mxu0 0.0
    %374 = vmatprep.subr.mxu0 0.0
    %375 = vmatpush1.msra.mxu0 0.0
    %376 = vmatprep.subr.mxu0 0.0
    %377 = vmatpush1.msra.mxu0 0.0
    %378 = vmatprep.subr.mxu0 0.0
    %379 = vmatpush1.msra.mxu0 0.0
    %380 = vmatprep.subr.mxu0 0.0
    %381 = vmatpush1.msra.mxu0 0.0
    %382 = vmatprep.subr.mxu0 0.0
    %383 = vmatpush1.msra.mxu0 0.0
    %384 = vmatprep.subr.mxu0 0.0
    %385 = vmatpush1.msra.mxu0 0.0
    %386 = vmatprep.subr.mxu0 0.0
    %387 = vmatpush1.msra.mxu0 0.0
    %388 = vmatprep.subr.mxu0 0.0
    %389 = vmatpush1.msra.mxu0 0.0
    %390 = vmatprep.subr.mxu0 0.0
    %391 = vmatpush1.msra.mxu0 0.0
    %392 = vmatprep.subr.mxu0 0.0
    %393 = vmatpush1.msra.mxu0 0.0
    %394 = vmatprep.subr.mxu0 0.0
    %395 = vmatpush1.msra.mxu0 %v354
    %396 = vmatprep.subr.mxu0 0.0
    %397 = vmatpush1.msra.mxu0 %v353
    %398 = vmatprep.subr.mxu0 0.0
    %399 = vmatpush1.msra.mxu0 %v352
    %400 = vmatprep.subr.mxu0 0.0
    %401 = vmatpush1.msra.mxu0 %v351
    %402 = vmatprep.subr.mxu0 0.0
    %403 = vmatpush2.msra.mxu0 0.0
    %404 = vmatprep.subr.mxu0 0.0
    %405 = vmatpush2.msra.mxu0 0.0
    %406 = vmatprep.subr.mxu0 0.0
    %407 = vmatpush2.msra.mxu0 0.0
    %408 = vmatprep.subr.mxu0 0.0
    %409 = vmatpush2.msra.mxu0 0.0
    %410 = vmatprep.subr.mxu0 0.0
    %411 = vmatpush2.msra.mxu0 0.0
    %412 = vmatprep.subr.mxu0 0.0
    %413 = vmatpush2.msra.mxu0 0.0
    %414 = vmatprep.subr.mxu0 0.0
    %415 = vmatpush2.msra.mxu0 0.0
    %416 = vmatprep.subr.mxu0 0.0
    %417 = vmatpush2.msra.mxu0 0.0
    %418 = vmatprep.subr.mxu0 0.0
    %419 = vmatpush2.msra.mxu0 0.0
    %420 = vmatprep.subr.mxu0 0.0
    %421 = vmatpush2.msra.mxu0 0.0
    %422 = vmatprep.subr.mxu0 0.0
    %423 = vmatpush2.msra.mxu0 0.0
    %424 = vmatprep.subr.mxu0 0.0
    %425 = vmatpush2.msra.mxu0 0.0
    %426 = vmatprep.subr.mxu0 0.0
    %427 = vmatpush2.msra.mxu0 0.0
    %428 = vmatprep.subr.mxu0 0.0
    %429 = vmatpush2.msra.mxu0 0.0
    %430 = vmatprep.subr.mxu0 0.0
    %431 = vmatpush2.msra.mxu0 0.0
    %432 = vmatprep.subr.mxu0 0.0
    %433 = vmatpush2.msra.mxu0 0.0
    %434 = vmatprep.mubr.f32.mxu0 0.0
    %435 = vmatmul.mubr.f32.gmra.mxu0 %v368
    %v436 = vpop.f32.mrf.mxu0
    %v437 = vadd.f32 %v365, %v436
    %v438 = vpop.f32.mrf.mxu0
    %439 = vdwg.mxu0
    %440 = vst [vmem:[#allocation3] sm:$0x1] %v437
    // Predicated region
    $region30: #{tpu_custom_call.1} parent=1 // pred_check
      _
    $region31: #{tpu_custom_call.1} parent=1 // pred_check_branch
      %442 = sbr.rel (0) target = $region33
    $region32: #{tpu_custom_call.1} parent=1 // pred_region
      %s444 = ssub.s32 16, 16
      %445 = vsyncadd [#allocation4], %s444
      %s447 = sshll.u32 [#allocation3], 4
      %s448 = int_to_ptr.vmem [resolvable:$true] %s447
      %450 = dma.vmem_to_hbm [thread:$0]  %s448, 16, %s7, [#allocation4]
    $region33: #{tpu_custom_call.1} parent=1 // pred_fallthru
      _
    // Predicated region
    $region34: #{tpu_custom_call.1} parent=1 // pred_check
      _
    $region35: #{tpu_custom_call.1} parent=1 // pred_check_branch
      %452 = sbr.rel (0) target = $region37
    $region36: #{tpu_custom_call.1} parent=1 // pred_region
      %453 = dma.done [#allocation4], 16
    $region37: #{tpu_custom_call.1} parent=1 // pred_fallthru
      _
    %454 = vsyncpa [#allocation4], 1

</llo_original>
